<compile_context>
chip_gen: v6e
topology: v6e:2x2x1
jax: 0.10.0
libtpu: 0.0.40
codegen_flags: <defaults>
</compile_context>

<pallas_src>
import math
import jax
import jax.numpy as jnp
from jax.experimental import pallas as pl
from jax.experimental.pallas import tpu as pltpu


# ----------------------------------------------------------------------------
# Kernels (pure DMA-bound VPU add)
# ----------------------------------------------------------------------------
def _add_pe_2d_kernel(x_ref, pe_ref, o_ref):
    # Lane-dense path. x/o: (tS, B*D); pe: (tS, D).
    # Broadcast pe across batch in-kernel (VPU/XLU slots are idle in this
    # DMA-bound kernel) rather than streaming a pre-tiled (S, B*D) buffer.
    b = x_ref.shape[1] // pe_ref.shape[1]
    pe = pe_ref[...]
    if b > 1:
        pe = jnp.tile(pe, (1, b))
    o_ref[...] = x_ref[...] + pe


def _add_pe_3d_kernel(x_ref, pe_ref, o_ref):
    # Dense 3D path (D % 128 == 0, B >= sublane multiple).
    # x/o: (tS, B, D); pe: (tS, 1, D) — sublane-broadcast over batch.
    o_ref[...] = x_ref[...] + pe_ref[...]


# ----------------------------------------------------------------------------
# Tiling policy
# ----------------------------------------------------------------------------
def _round_up(n: int, m: int) -> int:
    return ((n + m - 1) // m) * m


def _sublane_multiple(dtype) -> int:
    # f32 -> 8, bf16 -> 16, int8/fp8 -> 32 (sublane packing factor).
    return max(8, 32 // jnp.dtype(dtype).itemsize)


def _vmem_budget() -> tuple[int, int]:
    """(vmem_limit_bytes, double-buffered tile budget), generation-aware."""
    try:
        cap = getattr(pltpu.get_tpu_info(), "vmem_capacity_bytes", None)
    except Exception:  # query unavailable (e.g. interpret/CPU) -> be conservative
        cap = None
    if not cap:
        cap = 64 * 1024 * 1024                      # v7x per-TC worst case
    limit = min(64 * 1024 * 1024, (cap * 3) // 4)   # 48 MiB on 64 MiB parts,
    return limit, limit // 2                        # 64 MiB on 128 MiB parts


def _choose_seq_tile(S: int, padded_row_bytes: int, sub: int, budget: int) -> int:
    """Largest sublane-aligned seq tile whose double-buffered footprint fits
    the budget, capped so there are >= 2 grid steps when S allows (shards work
    across v7x's 2 TensorCores and keeps input/output DMA overlapped)."""
    tS = budget // (2 * max(padded_row_bytes, 1))
    tS = min(tS, pl.cdiv(S, 2))
    tS = max(sub, (tS // sub) * sub)
    return min(tS, S)


# ----------------------------------------------------------------------------
# pos_enc buffer (same values / shape as the PyTorch registered buffer)
# ----------------------------------------------------------------------------
def make_pos_enc(seq_len: int, size: int, dtype=jnp.float32) -> jnp.ndarray:
    position = jnp.arange(seq_len, dtype=jnp.float32)[:, None]            # (S, 1)
    div_term = jnp.exp(jnp.arange(0, size, 2, dtype=jnp.float32)
                       * (-math.log(10000.0) / size))                     # (ceil(D/2),)
    angles = position * div_term                                          # (S, ceil(D/2))
    pe = jnp.zeros((seq_len, size), dtype=jnp.float32)
    pe = pe.at[:, 0::2].set(jnp.sin(angles))
    pe = pe.at[:, 1::2].set(jnp.cos(angles)[:, : size // 2])              # guard odd size
    return pe[:, None, :].astype(dtype)                                   # (seq_len, 1, D)


# ----------------------------------------------------------------------------
# Forward
# ----------------------------------------------------------------------------
def positional_encoding_forward(x: jnp.ndarray, pos_enc: jnp.ndarray,
                                *, donate_x: bool = False) -> jnp.ndarray:
    """x: (S, B, D). pos_enc: (seq_len, 1, D) or (seq_len, D), seq_len >= S.
    Only the first S rows are read — selected via the grid/index_map.
    NOTE(perf): prefer donate_x=True when the caller actually donates x, and
    ideally fuse this add into the producing/consuming op; a standalone add
    cannot go below the ~2*|x| HBM-byte roofline."""
    S, B, D = x.shape
    pe2d = pos_enc.reshape(pos_enc.shape[0], pos_enc.shape[-1])
    seq_len = pe2d.shape[0]
    assert pe2d.shape[1] == D and seq_len >= S
    if pe2d.dtype != x.dtype:
        # Ideally the caller builds pos_enc in x.dtype so this is a no-op.
        pe2d = pe2d.astype(x.dtype)

    sub = _sublane_multiple(x.dtype)
    itemsize = jnp.dtype(x.dtype).itemsize
    vmem_limit, tile_budget = _vmem_budget()
    alias = {0: 0} if donate_x else {}
    cparams = pltpu.CompilerParams(
        dimension_semantics=("parallel",),      # seq blocks shard across v7x's 2 TCs
        vmem_limit_bytes=vmem_limit,
    )

    lane_fold_ok = (B * D) % 128 == 0

    # --- 2D lane-dense fold: (S, B, D) -> (S, B*D) ---------------------------
    # Taken whenever the fold is lane-dense AND it actually helps: D not a
    # 128-multiple, or small batch (sublane padding of the (B, D) plane would
    # waste up to 8/B of DMA and vregs).
    if lane_fold_ok and (D % 128 != 0 or B < sub):
        x2 = x.reshape(S, B * D)
        padded_bd = _round_up(B * D, 128)
        padded_d = _round_up(D, 128)
        row_bytes = itemsize * (2 * padded_bd + padded_d)   # x + out + pe per seq row
        tS = _choose_seq_tile(S, row_bytes, sub, tile_budget)
        out2 = pl.pallas_call(
            _add_pe_2d_kernel,
            out_shape=jax.ShapeDtypeStruct((S, B * D), x.dtype),
            grid=(pl.cdiv(S, tS),),
            in_specs=[
                pl.BlockSpec((tS, B * D), lambda i: (i, 0)),
                pl.BlockSpec((tS, D), lambda i: (i, 0)),     # tiny pe tile, no pre-tiling
            ],
            out_specs=pl.BlockSpec((tS, B * D), lambda i: (i, 0)),
            input_output_aliases=alias,
            compiler_params=cparams,
        )(x2, pe2d)
        return out2.reshape(S, B, D)

    # --- 3D path: D lane-dense, B large enough to fill sublanes --------------
    if D % 128 == 0:
        pe3 = pe2d[:, None, :]
        padded_b = _round_up(B, sub)
        padded_d = _round_up(D, 128)
        # Padded VMEM footprint per seq row: x + out blocks (padded_b x padded_d)
        # plus the pe block whose size-1 sublane dim pads to `sub`.
        row_bytes = itemsize * (2 * padded_b * padded_d + sub * padded_d)
        tS = _choose_seq_tile(S, row_bytes, sub, tile_budget)
        return pl.pallas_call(
            _add_pe_3d_kernel,
            out_shape=jax.ShapeDtypeStruct((S, B, D), x.dtype),
            grid=(pl.cdiv(S, tS),),
            in_specs=[
                pl.BlockSpec((tS, B, D), lambda i: (i, 0, 0)),
                pl.BlockSpec((tS, 1, D), lambda i: (i, 0, 0)),
            ],
            out_specs=pl.BlockSpec((tS, B, D), lambda i: (i, 0, 0)),
            input_output_aliases=alias,
            compiler_params=cparams,
        )(x, pe3)

    # --- Fallback: no lane-friendly layout (D%128!=0 and B*D%128!=0) ---------
    # A Pallas kernel here would emit masked partial stores (~4.5x penalty);
    # XLA's fused broadcast-add matches or beats it with no launch overhead.
    return x + pe2d[:S][:, None, :]


if __name__ == "__main__":
    key = jax.random.PRNGKey(0)
    k1, k2, k3 = jax.random.split(key, 3)
    dtype = jnp.float32

    # Case 1 — lane-dense 2D fold path (B*D % 128 == 0, small batch).
    S1, B1, D1, L1 = 8, 2, 64, 16
    x1 = jax.random.normal(k1, (S1, B1, D1), dtype=dtype)
    pe1 = make_pos_enc(L1, D1, dtype=dtype)
    out1 = jax.block_until_ready(positional_encoding_forward(x1, pe1))
    ref1 = x1 + pe1[:S1]
    assert out1.shape == (S1, B1, D1) and jnp.allclose(out1, ref1, atol=1e-6)

    # Case 2 — dense 3D path (D % 128 == 0, B >= sublane multiple).
    S2, B2, D2, L2 = 16, 8, 128, 32
    x2 = jax.random.normal(k2, (S2, B2, D2), dtype=dtype)
    pe2 = make_pos_enc(L2, D2, dtype=dtype)
    out2 = jax.block_until_ready(positional_encoding_forward(x2, pe2))
    ref2 = x2 + pe2[:S2]
    assert out2.shape == (S2, B2, D2) and jnp.allclose(out2, ref2, atol=1e-6)

    # Case 3 — the module's toy config (size=32, seq_len=16, batch=2, seq=8):
    # B*D = 64 is not a lane multiple -> plain fused XLA fallback by design.
    S3, B3, D3, L3 = 8, 2, 32, 16
    x3 = jax.random.normal(k3, (S3, B3, D3), dtype=dtype)
    pe3 = make_pos_enc(L3, D3, dtype=dtype)
    out3 = jax.block_until_ready(positional_encoding_forward(x3, pe3))
    ref3 = x3 + pe3[:S3]
    assert out3.shape == (S3, B3, D3) and jnp.allclose(out3, ref3, atol=1e-6)

    # TODO(synk): nn.Dropout is declared in __init__ but never applied in
    # forward, so no dropout is implemented here (matches the reference).
    print("KERNEL_OK")
</pallas_src>

<mosaic_0001>
module attributes {stable_mosaic.version = 11 : i64} {
  func.func @_add_pe_2d_kernel(%arg0: i32, %arg1: memref<8x128xf32, #tpu.memory_space<vmem>>, %arg2: memref<8x64xf32, #tpu.memory_space<vmem>>, %arg3: memref<8x128xf32, #tpu.memory_space<vmem>>) attributes {dimension_semantics = [#tpu.dimension_semantics<parallel>], iteration_bounds = array<i64: 1>, scalar_prefetch = 0 : i64, scratch_operands = 0 : i64, tpu.core_type = #tpu.core_type<tc>, window_params = [{transform_indices = @transform_0, window_bounds = array<i64: 8, 128>}, {transform_indices = @transform_1, window_bounds = array<i64: 8, 64>}, {transform_indices = @transform_2, window_bounds = array<i64: 8, 128>}]} {
    %c0 = arith.constant 0 : index
    %c0_0 = arith.constant 0 : index
    %0 = vector.load %arg2[%c0, %c0_0] : memref<8x64xf32, #tpu.memory_space<vmem>>, vector<8x64xf32>
    %1 = tpu.concatenate %0, %0 in 1 : vector<8x64xf32>, vector<8x64xf32> -> vector<8x128xf32>
    %c0_1 = arith.constant 0 : index
    %c0_2 = arith.constant 0 : index
    %2 = vector.load %arg1[%c0_1, %c0_2] : memref<8x128xf32, #tpu.memory_space<vmem>>, vector<8x128xf32>
    %3 = arith.addf %2, %1 : vector<8x128xf32>
    %c0_3 = arith.constant 0 : index
    %c0_4 = arith.constant 0 : index
    %4 = vector.load %arg3[%c0_3, %c0_4] : memref<8x128xf32, #tpu.memory_space<vmem>>, vector<8x128xf32>
    tpu.vector_store %arg3[%c0_3, %c0_4], %3 {strides = array<i32>} : memref<8x128xf32, #tpu.memory_space<vmem>>, vector<8x128xf32>,
    return
  }
  func.func @transform_0(%arg0: i32) -> (i32, i32) {
    %c0_i32 = arith.constant 0 : i32
    %c0_i32_0 = arith.constant 0 : i32
    return %arg0, %c0_i32 : i32, i32
  }
  func.func @transform_1(%arg0: i32) -> (i32, i32) {
    %c0_i32 = arith.constant 0 : i32
    %c0_i32_0 = arith.constant 0 : i32
    return %arg0, %c0_i32 : i32, i32
  }
  func.func @transform_2(%arg0: i32) -> (i32, i32) {
    %c0_i32 = arith.constant 0 : i32
    %c0_i32_0 = arith.constant 0 : i32
    return %arg0, %c0_i32 : i32, i32
  }
}

</mosaic_0001>

<llo_original>
// kernel: tpu_custom_call.1
$region0: #{tpu_custom_call.1}
  #allocation0 [shape = 'u32[]', space=smem, size = 0x4, offset = 0x4, fixed_abs, tag = 'smem constant byte address 0x4 - core index']
  #allocation1 [shape = 'u32[144,128]{1,0:T(1,128)}', space=vmem, size = 0x12000, scoped, tag = 'internal scratch']
  %s0 = inlined_call_operand.hbm [shape: f32[8,128], index: 0, kind: input, shape index: {}]
  %s1 = inlined_call_operand.hbm [shape: f32[16,64], index: 1, kind: input, shape index: {}]
  %s2 = inlined_call_operand.hbm [shape: f32[8,128], index: 2, kind: output, shape index: {}]
  %s3 = sld [smem:[#allocation0]]
  $region26: #{tpu_custom_call.1} parent=0
    _
  %s5 = ssub.s32 1, %s3
  %s6 = scalar_select 0, %s5, %s3
  $region1: #{tpu_custom_call.1} parent=0
    #allocation2 [shape = 'u8[4096]{0}', space=vmem, size = 0x1000, scoped, tag = 'input window, operand 0, single buffered']
    #allocation3 [shape = 's32[1]{0}', space=sflag, size = 0x4, scoped, tag = 'scoped memory for tpu_custom_call.1']
    #allocation4 [shape = 's32[1]{0}', space=sflag, size = 0x4, scoped, tag = 'scoped memory for tpu_custom_call.1']
    #allocation5 [shape = 'u8[4096]{0}', space=vmem, size = 0x1000, scoped, tag = 'input window, operand 1, single buffered']
    #allocation6 [shape = 's32[1]{0}', space=sflag, size = 0x4, scoped, tag = 'scoped memory for tpu_custom_call.1']
    #allocation7 [shape = 'u8[4096]{0}', space=vmem, size = 0x1000, scoped, tag = 'output window, operand 0, single buffered']
    %7 = vsyncpa [#allocation3], 0
    %8 = vsyncpa [#allocation6], 0
    %9 = vsyncpa [#allocation4], 0
    // Predicated region
    $region2: #{tpu_custom_call.1} parent=1 // pred_check
      _
    $region3: #{tpu_custom_call.1} parent=1 // pred_check_branch
      %11 = sbr.rel (0) target = $region5
    $region4: #{tpu_custom_call.1} parent=1 // pred_region
      %s13 = ssub.s32 128, 128
      %14 = vsyncadd [#allocation3], %s13
      %s16 = sshll.u32 [#allocation2], 4
      %s17 = int_to_ptr.vmem [resolvable:$true] %s16
      %19 = dma.hbm_to_vmem [thread:$0]  %s0, 128, %s17, [#allocation3]
    $region5: #{tpu_custom_call.1} parent=1 // pred_fallthru
      _
    // Predicated region
    $region6: #{tpu_custom_call.1} parent=1 // pred_check
      _
    $region7: #{tpu_custom_call.1} parent=1 // pred_check_branch
      %21 = sbr.rel (0) target = $region9
    $region8: #{tpu_custom_call.1} parent=1 // pred_region
      %s23 = ssub.s32 128, 128
      %24 = vsyncadd [#allocation6], %s23
      %s26 = sshll.u32 [#allocation5], 4
      %s27 = int_to_ptr.vmem [resolvable:$true] %s26
      %29 = dma.hbm_to_vmem [thread:$0]  %s1, 128, %s27, [#allocation6]
    $region9: #{tpu_custom_call.1} parent=1 // pred_fallthru
      _
    // Predicated region
    $region10: #{tpu_custom_call.1} parent=1 // pred_check
      _
    $region11: #{tpu_custom_call.1} parent=1 // pred_check_branch
      %31 = sbr.rel (0) target = $region13
    $region12: #{tpu_custom_call.1} parent=1 // pred_region
      %32 = dma.done [#allocation3], 128
    $region13: #{tpu_custom_call.1} parent=1 // pred_fallthru
      _
    // Predicated region
    $region14: #{tpu_custom_call.1} parent=1 // pred_check
      _
    $region15: #{tpu_custom_call.1} parent=1 // pred_check_branch
      %34 = sbr.rel (0) target = $region17
    $region16: #{tpu_custom_call.1} parent=1 // pred_region
      %35 = dma.done [#allocation6], 128
    $region17: #{tpu_custom_call.1} parent=1 // pred_fallthru
      _
    %v36 = vld [vmem:[#allocation5] sm:$0xff]
    %38 = vrot.lane.b32.xlu0 %v36, 64
    %v39 = vpop.permute.xlu0 %38
    %vm41 = vcmask 523264
    %v42 = vsel %vm41, %v36, %v39
    %v43 = vld [vmem:[#allocation2] sm:$0xff]
    %v44 = vadd.f32 %v43, %v42
    %45 = vst [vmem:[#allocation7] sm:$0xff] %v44
    // Predicated region
    $region18: #{tpu_custom_call.1} parent=1 // pred_check
      _
    $region19: #{tpu_custom_call.1} parent=1 // pred_check_branch
      %47 = sbr.rel (0) target = $region21
    $region20: #{tpu_custom_call.1} parent=1 // pred_region
      %s49 = ssub.s32 128, 128
      %50 = vsyncadd [#allocation4], %s49
      %s52 = sshll.u32 [#allocation7], 4
      %s53 = int_to_ptr.vmem [resolvable:$true] %s52
      %55 = dma.vmem_to_hbm [thread:$0]  %s53, 128, %s2, [#allocation4]
    $region21: #{tpu_custom_call.1} parent=1 // pred_fallthru
      _
    // Predicated region
    $region22: #{tpu_custom_call.1} parent=1 // pred_check
      _
    $region23: #{tpu_custom_call.1} parent=1 // pred_check_branch
      %57 = sbr.rel (0) target = $region25
    $region24: #{tpu_custom_call.1} parent=1 // pred_region
      %58 = dma.done [#allocation4], 128
    $region25: #{tpu_custom_call.1} parent=1 // pred_fallthru
      _
    %59 = vsyncpa [#allocation3], 1
    %60 = vsyncpa [#allocation6], 1
    %61 = vsyncpa [#allocation4], 1

</llo_original>
